<compile_context>
chip_gen: v6e
topology: v6e:2x2x1
jax: 0.10.0
libtpu: 0.0.40
codegen_flags: <defaults>
</compile_context>

<pallas_src>
import math

import jax
import jax.numpy as jnp
from jax.experimental import pallas as pl
from jax.experimental.pallas import tpu as pltpu


def _round_up(x, m):
    return ((x + m - 1) // m) * m


# ----------------------------- Pallas kernel -----------------------------

def _cls_score_kernel(x_ref, w_ref, b_ref, o_ref):
    # x_ref: (tm, K)   w_ref: (K, Np)   b_ref: (1, Np)   o_ref: (tm, Np)
    acc = jnp.dot(x_ref[...], w_ref[...], preferred_element_type=jnp.float32)
    o_ref[...] = (acc + b_ref[...]).astype(o_ref.dtype)


def cls_score_pallas(x2, w, b, *, max_tm=256):
    """y = x2 @ w + b  with x2: (M, K), w: (K, N), b: (N,).  Single pallas_call."""
    M, K = x2.shape
    Kw, N = w.shape
    assert K == Kw, (K, Kw)

    # Lane-dense output: pad N up to a multiple of 128 (zeros), slice afterwards.
    Np = _round_up(N, 128)
    # Rows: pad to a multiple of 8; one big tile when M is small, else tile rows.
    Mp = _round_up(max(M, 8), 8)
    tm = min(Mp, max_tm)
    Mp = _round_up(Mp, tm)

    if Mp != M:
        x2 = jnp.pad(x2, ((0, Mp - M), (0, 0)))
    wp = jnp.pad(w, ((0, 0), (0, Np - N))) if Np != N else w
    bp = jnp.pad(b, (0, Np - N)) if Np != N else b
    bp = bp.reshape(1, Np)

    itemsize = jnp.dtype(x2.dtype).itemsize
    cost = pl.CostEstimate(
        flops=2 * Mp * K * Np,
        transcendentals=0,
        bytes_accessed=(Mp * K + K * Np + Np + Mp * Np) * itemsize,
    )

    out = pl.pallas_call(
        _cls_score_kernel,
        out_shape=jax.ShapeDtypeStruct((Mp, Np), x2.dtype),
        grid=(Mp // tm,),
        in_specs=[
            pl.BlockSpec((tm, K), lambda i: (i, 0)),
            pl.BlockSpec((K, Np), lambda i: (0, 0)),
            pl.BlockSpec((1, Np), lambda i: (0, 0)),
        ],
        out_specs=pl.BlockSpec((tm, Np), lambda i: (i, 0)),
        compiler_params=pltpu.CompilerParams(
            dimension_semantics=("parallel",)),
        cost_estimate=cost,
    )(x2, wp, bp)
    return out[:M, :N]


# ----------------------------- Module wrapper -----------------------------

def init_oicr_output_params(key, fc_dim, num_classes, dtype=jnp.float32):
    """Matches the PyTorch init: weight ~ N(0, 0.01), bias = 0.

    Weight is stored (fc_dim, num_classes + 1) = PyTorch weight.T for the
    kernel's (M,K)@(K,N) layout.
    """
    n_out = num_classes + 1
    w = (0.01 * jax.random.normal(key, (fc_dim, n_out))).astype(dtype)
    b = jnp.zeros((n_out,), dtype=dtype)
    return w, b


@jax.jit
def oicr_output_forward(x, w, b):
    """x: (..., FC_DIM)  ->  (..., NUM_CLASSES + 1)   (== self.cls_score(x))."""
    lead = x.shape[:-1]
    K = x.shape[-1]
    M = math.prod(lead) if lead else 1
    y = cls_score_pallas(x.reshape(M, K), w, b)
    return y.reshape(*lead, w.shape[1])


def oicr_output_ref(x, w, b):
    """Pure-JAX reference for correctness checking."""
    return x @ w + b


if __name__ == "__main__":
    # Small config consistent with the module:
    #   FC_DIM = 32 (hidden), NUM_CLASSES = 19 -> 20 output logits
    #   x: (batch=2, proposals=8, FC_DIM)
    B, S = 2, 8
    FC_DIM = 32
    NUM_CLASSES = 19

    key = jax.random.PRNGKey(0)
    key, xk, wk = jax.random.split(key, 3)
    x = jax.random.normal(xk, (B, S, FC_DIM), dtype=jnp.float32)
    w, b = init_oicr_output_params(wk, FC_DIM, NUM_CLASSES)

    out = oicr_output_forward(x, w, b)
    out = jax.block_until_ready(out)

    ref = oicr_output_ref(x, w, b)
    assert out.shape == (B, S, NUM_CLASSES + 1), out.shape
    assert jnp.allclose(out, ref, atol=1e-5, rtol=1e-5), "mismatch vs reference"

    print("KERNEL_OK")
</pallas_src>

<mosaic_0001>
module attributes {stable_mosaic.version = 11 : i64} {
  func.func @_cls_score_kernel(%arg0: i32, %arg1: memref<16x32xf32, #tpu.memory_space<vmem>>, %arg2: memref<32x128xf32, #tpu.memory_space<vmem>>, %arg3: memref<1x128xf32, #tpu.memory_space<vmem>>, %arg4: memref<16x128xf32, #tpu.memory_space<vmem>>) attributes {dimension_semantics = [#tpu.dimension_semantics<parallel>], iteration_bounds = array<i64: 1>, scalar_prefetch = 0 : i64, scratch_operands = 0 : i64, tpu.core_type = #tpu.core_type<tc>, window_params = [{transform_indices = @transform_0, window_bounds = array<i64: 16, 32>}, {pipeline_mode = #tpu.pipeline_mode<synchronous>, transform_indices = @transform_1, window_bounds = array<i64: 32, 128>}, {pipeline_mode = #tpu.pipeline_mode<synchronous>, transform_indices = @transform_2, window_bounds = array<i64: 1, 128>}, {transform_indices = @transform_3, window_bounds = array<i64: 16, 128>}]} {
    %c0 = arith.constant 0 : index
    %c0_0 = arith.constant 0 : index
    %0 = vector.load %arg1[%c0, %c0_0] : memref<16x32xf32, #tpu.memory_space<vmem>>, vector<16x32xf32>
    %c0_1 = arith.constant 0 : index
    %c0_2 = arith.constant 0 : index
    %1 = vector.load %arg2[%c0_1, %c0_2] : memref<32x128xf32, #tpu.memory_space<vmem>>, vector<32x128xf32>
    %cst = arith.constant dense<0.000000e+00> : vector<16x128xf32>
    %2 = tpu.matmul %0, %1, %cst {dimension_numbers = #tpu.dot_dimension_numbers<[1], [0], [0], [1], [0, 0, 1, 1], [], []>} : vector<16x32xf32>, vector<32x128xf32>, vector<16x128xf32> -> vector<16x128xf32>
    %c0_3 = arith.constant 0 : index
    %c0_4 = arith.constant 0 : index
    %3 = vector.load %arg3[%c0_3, %c0_4] : memref<1x128xf32, #tpu.memory_space<vmem>>, vector<1x128xf32>
    %4 = vector.broadcast %3 : vector<1x128xf32> to vector<16x128xf32>
    %5 = arith.addf %2, %4 : vector<16x128xf32>
    %c0_5 = arith.constant 0 : index
    %c0_6 = arith.constant 0 : index
    %6 = vector.load %arg4[%c0_5, %c0_6] : memref<16x128xf32, #tpu.memory_space<vmem>>, vector<16x128xf32>
    tpu.vector_store %arg4[%c0_5, %c0_6], %5 {strides = array<i32>} : memref<16x128xf32, #tpu.memory_space<vmem>>, vector<16x128xf32>,
    return
  }
  func.func @transform_0(%arg0: i32) -> (i32, i32) {
    %c0_i32 = arith.constant 0 : i32
    %c0_i32_0 = arith.constant 0 : i32
    return %arg0, %c0_i32 : i32, i32
  }
  func.func @transform_1(%arg0: i32) -> (i32, i32) {
    %c0_i32 = arith.constant 0 : i32
    %c0_i32_0 = arith.constant 0 : i32
    %c0_i32_1 = arith.constant 0 : i32
    return %c0_i32, %c0_i32_0 : i32, i32
  }
  func.func @transform_2(%arg0: i32) -> (i32, i32) {
    %c0_i32 = arith.constant 0 : i32
    %c0_i32_0 = arith.constant 0 : i32
    %c0_i32_1 = arith.constant 0 : i32
    return %c0_i32, %c0_i32_0 : i32, i32
  }
  func.func @transform_3(%arg0: i32) -> (i32, i32) {
    %c0_i32 = arith.constant 0 : i32
    %c0_i32_0 = arith.constant 0 : i32
    return %arg0, %c0_i32 : i32, i32
  }
}

</mosaic_0001>

<llo_original>
// kernel: oicr_output_forward.1
$region0: #{oicr_output_forward.1}
  #allocation0 [shape = 'u32[]', space=smem, size = 0x4, offset = 0x4, fixed_abs, tag = 'smem constant byte address 0x4 - core index']
  #allocation1 [shape = 'u32[144,128]{1,0:T(1,128)}', space=vmem, size = 0x12000, scoped, tag = 'internal scratch']
  %s0 = inlined_call_operand.vmem [shape: f32[16,32], index: 0, kind: input, shape index: {}]
  %s1 = inlined_call_operand.vmem [shape: f32[32,128], index: 1, kind: input, shape index: {}]
  %s2 = inlined_call_operand.vmem [shape: f32[1,128], index: 2, kind: input, shape index: {}]
  %s3 = inlined_call_operand.vmem [shape: f32[16,128], index: 3, kind: output, shape index: {}]
  %s4 = sld [smem:[#allocation0]]
  $region22: #{oicr_output_forward.1} parent=0
    _
  %s6 = ssub.s32 1, %s4
  %s7 = scalar_select 0, %s6, %s4
  // Predicated region
  $region2: #{oicr_output_forward.1} parent=0 // pred_check
    _
  $region3: #{oicr_output_forward.1} parent=0 // pred_check_branch
    %9 = sbr.rel (0) target = $region5
  $region4: #{oicr_output_forward.1} parent=0 // pred_region
    _
  $region5: #{oicr_output_forward.1} parent=0 // pred_fallthru
    _
  // Predicated region
  $region6: #{oicr_output_forward.1} parent=0 // pred_check
    _
  $region7: #{oicr_output_forward.1} parent=0 // pred_check_branch
    %11 = sbr.rel (0) target = $region9
  $region8: #{oicr_output_forward.1} parent=0 // pred_region
    _
  $region9: #{oicr_output_forward.1} parent=0 // pred_fallthru
    _
  // Predicated region
  $region10: #{oicr_output_forward.1} parent=0 // pred_check
    _
  $region11: #{oicr_output_forward.1} parent=0 // pred_check_branch
    %13 = sbr.rel (0) target = $region13
  $region12: #{oicr_output_forward.1} parent=0 // pred_region
    _
  $region13: #{oicr_output_forward.1} parent=0 // pred_fallthru
    _
  %v14 = vld [vmem:[%s0] sm:$0xff]
  %v15 = vld [vmem:[%s0 + $0x8] sm:$0xff]
  %v16 = vld [vmem:[%s1] sm:$0xff]
  %v17 = vld [vmem:[%s1 + $0x8] sm:$0xff]
  %v18 = vld [vmem:[%s1 + $0x10] sm:$0xff]
  %v19 = vld [vmem:[%s1 + $0x18] sm:$0xff]
  %v20 = vld [vmem:[%s2] sm:$0x1]
  %v22 = vlaneseq
  %v23 = vshrl.u32 %v22, 7
  %v24 = vsub.s32 0, %v23
  %v25 = vrot.slane %v20, %v24
  %vm27 = vcmask 261120
  %v29 = vsel %vm27, %v14, 0
  %v32 = vsel %vm27, %v15, 0
  %34 = vmatprep.subr.mxu0 0.0
  %35 = vmatpush1.msra.mxu0 0.0
  %36 = vmatprep.subr.mxu0 0.0
  %37 = vmatpush1.msra.mxu0 0.0
  %38 = vmatprep.subr.mxu0 0.0
  %39 = vmatpush1.msra.mxu0 0.0
  %40 = vmatprep.subr.mxu0 0.0
  %41 = vmatpush1.msra.mxu0 0.0
  %42 = vmatprep.subr.mxu0 0.0
  %43 = vmatpush1.msra.mxu0 0.0
  %44 = vmatprep.subr.mxu0 0.0
  %45 = vmatpush1.msra.mxu0 0.0
  %46 = vmatprep.subr.mxu0 0.0
  %47 = vmatpush1.msra.mxu0 0.0
  %48 = vmatprep.subr.mxu0 0.0
  %49 = vmatpush1.msra.mxu0 0.0
  %50 = vmatprep.subr.mxu0 0.0
  %51 = vmatpush1.msra.mxu0 0.0
  %52 = vmatprep.subr.mxu0 0.0
  %53 = vmatpush1.msra.mxu0 0.0
  %54 = vmatprep.subr.mxu0 0.0
  %55 = vmatpush1.msra.mxu0 0.0
  %56 = vmatprep.subr.mxu0 0.0
  %57 = vmatpush1.msra.mxu0 0.0
  %58 = vmatprep.subr.mxu0 0.0
  %59 = vmatpush1.msra.mxu0 %v19
  %60 = vmatprep.subr.mxu0 0.0
  %61 = vmatpush1.msra.mxu0 %v18
  %62 = vmatprep.subr.mxu0 0.0
  %63 = vmatpush1.msra.mxu0 %v17
  %64 = vmatprep.subr.mxu0 0.0
  %65 = vmatpush1.msra.mxu0 %v16
  %66 = vmatprep.subr.mxu0 0.0
  %67 = vmatpush2.msra.mxu0 0.0
  %68 = vmatprep.subr.mxu0 0.0
  %69 = vmatpush2.msra.mxu0 0.0
  %70 = vmatprep.subr.mxu0 0.0
  %71 = vmatpush2.msra.mxu0 0.0
  %72 = vmatprep.subr.mxu0 0.0
  %73 = vmatpush2.msra.mxu0 0.0
  %74 = vmatprep.subr.mxu0 0.0
  %75 = vmatpush2.msra.mxu0 0.0
  %76 = vmatprep.subr.mxu0 0.0
  %77 = vmatpush2.msra.mxu0 0.0
  %78 = vmatprep.subr.mxu0 0.0
  %79 = vmatpush2.msra.mxu0 0.0
  %80 = vmatprep.subr.mxu0 0.0
  %81 = vmatpush2.msra.mxu0 0.0
  %82 = vmatprep.subr.mxu0 0.0
  %83 = vmatpush2.msra.mxu0 0.0
  %84 = vmatprep.subr.mxu0 0.0
  %85 = vmatpush2.msra.mxu0 0.0
  %86 = vmatprep.subr.mxu0 0.0
  %87 = vmatpush2.msra.mxu0 0.0
  %88 = vmatprep.subr.mxu0 0.0
  %89 = vmatpush2.msra.mxu0 0.0
  %90 = vmatprep.subr.mxu0 0.0
  %91 = vmatpush2.msra.mxu0 0.0
  %92 = vmatprep.subr.mxu0 0.0
  %93 = vmatpush2.msra.mxu0 0.0
  %94 = vmatprep.subr.mxu0 0.0
  %95 = vmatpush2.msra.mxu0 0.0
  %96 = vmatprep.subr.mxu0 0.0
  %97 = vmatpush2.msra.mxu0 0.0
  %98 = vmatprep.mubr.f32.mxu0 0.0
  %99 = vmatmul.mubr.f32.gmra.mxu0 %v29
  %v100 = vpop.f32.mrf.mxu0
  %v101 = vadd.f32 %v25, %v100
  %v102 = vpop.f32.mrf.mxu0
  %103 = vmatprep.mubr.f32.mxu0 0.0
  %104 = vmatmul.mubr.f32.gmra.mxu0 %v32
  %v105 = vpop.f32.mrf.mxu0
  %v106 = vadd.f32 %v25, %v105
  %v107 = vpop.f32.mrf.mxu0
  %108 = vdwg.mxu0
  %109 = vst [vmem:[%s3] sm:$0xff] %v101
  %110 = vst [vmem:[%s3 + $0x8] sm:$0xff] %v106
  // Predicated region
  $region14: #{oicr_output_forward.1} parent=0 // pred_check
    _
  $region15: #{oicr_output_forward.1} parent=0 // pred_check_branch
    %112 = sbr.rel (0) target = $region17
  $region16: #{oicr_output_forward.1} parent=0 // pred_region
    _
  $region17: #{oicr_output_forward.1} parent=0 // pred_fallthru
    _
  // Predicated region
  $region18: #{oicr_output_forward.1} parent=0 // pred_check
    _
  $region19: #{oicr_output_forward.1} parent=0 // pred_check_branch
    %114 = sbr.rel (0) target = $region21
  $region20: #{oicr_output_forward.1} parent=0 // pred_region
    _
  $region21: #{oicr_output_forward.1} parent=0 // pred_fallthru
    _

</llo_original>
